<compile_context>
chip_gen: v7x
topology: tpu7x:2x2x1
jax: 0.10.0
libtpu: 0.0.40
codegen_flags: <defaults>
</compile_context>

<pallas_src>
import functools

import numpy as np
import jax
import jax.numpy as jnp
from jax import lax
from jax.experimental import pallas as pl
from jax.experimental.pallas import tpu as pltpu


def _attention_kernel(v_ref, q_ref, w1_ref, wq_ref, bq_ref, w2_ref, b2_ref,
                      vw_ref, logits_ref, *, bblk, n_obj):
    # Block shapes (one batch block per grid step; lanes = bblk * n_obj):
    #   v_ref:      (Cv, lanes)    features x (batch, object); objects vary fastest
    #   q_ref:      (bblk, Cq)
    #   w1_ref:     (H, Cv)        conv_1 weight (1x1, no bias)
    #   wq_ref:     (H, Cq)        ques_linear weight
    #   bq_ref:     (H, 1)         ques_linear bias
    #   w2_ref:     (G, H)         conv_2 weight (1x1)
    #   b2_ref:     (G, 1)         conv_2 bias
    #   vw_ref:     (bblk, G, Cv)  attention-weighted features
    #   logits_ref: (G, lanes)     pre-softmax attention logits (attn_op)
    f32 = jnp.float32
    lanes = bblk * n_obj

    # ques_linear for the whole block in one matmul: q_h[h, b]
    q_h = lax.dot_general(wq_ref[...], q_ref[...], (((1,), (1,)), ((), ())),
                          preferred_element_type=f32) + bq_ref[...]           # [H, bblk]

    # Broadcast q_h over each batch element's n_obj object columns with a 0/1 expansion
    # matmul (column j belongs to batch j // n_obj).  Keeps the broadcast on the MXU
    # and avoids lane-axis relayouts.
    col = lax.broadcasted_iota(jnp.int32, (bblk, lanes), 1)
    row = lax.broadcasted_iota(jnp.int32, (bblk, lanes), 0)
    expand = jnp.logical_and(col >= row * n_obj,
                             col < (row + 1) * n_obj).astype(f32)             # [bblk, lanes]
    q_exp = jnp.dot(q_h, expand, preferred_element_type=f32)                  # [H, lanes]

    # conv_1 (1x1, no bias), batched across the whole block: [H, Cv] @ [Cv, lanes]
    v_a = lax.dot_general(w1_ref[...], v_ref[...], (((1,), (0,)), ((), ())),
                          preferred_element_type=f32)                         # [H, lanes]

    # x = relu(v_a + q) - (v_a - q)^2 on the full lane-dense tile (VPU)
    x = jnp.maximum(v_a + q_exp, 0.0) - (v_a - q_exp) ** 2                    # [H, lanes]

    # conv_2, batched:  [G, H] @ [H, lanes] + b2
    logits = lax.dot_general(w2_ref[...], x.astype(w2_ref.dtype),
                             (((1,), (0,)), ((), ())),
                             preferred_element_type=f32) + b2_ref[...]        # [G, lanes]
    logits_ref[...] = logits           # single fully lane-dense store (attn_op)

    # Per-batch-element softmax over objects + attention-weighted feature sum.
    # Static unroll with static slices: each iteration only keeps a small [G, Cv] result
    # live before storing it, and the b*n_obj lane offsets stay compile-time constants
    # (robust lowering of the unaligned lane slices of v_ref).  The [G,N]x[Cv,N]^T
    # matmul is a non-target per the perf review (K = n_obj is small); v is only
    # re-read from VMEM here.
    for b in range(bblk):
        sl = slice(b * n_obj, (b + 1) * n_obj)
        logits_b = logits[:, sl]                                              # [G, N]
        m = jnp.max(logits_b, axis=1, keepdims=True)
        e = jnp.exp(logits_b - m)
        s = jnp.sum(e, axis=1, keepdims=True)
        attn_b = e / s                 # exact divide (parity with the torch softmax)
        v_b = v_ref[:, sl]                                                    # [Cv, N]
        vw_b = lax.dot_general(attn_b.astype(v_b.dtype), v_b,
                               (((1,), (1,)), ((), ())),
                               preferred_element_type=f32)                    # [G, Cv]
        vw_ref[b] = vw_b               # lane-dense [G, Cv] store


def _pick_bblk(batch, n_obj, v_dim, itemsize, *, min_lanes=256,
               vmem_budget=24 * 1024 * 1024):
    """Batch block size.

    Constraints: bblk*n_obj (the block lane width) must be a multiple of 128 and
    >= min_lanes so MXU pushes are full width (v6e/v7x tiles are 256 wide); bblk must
    be a multiple of 8 (sublane rule for the q / v_weighted blocks).  The minimal
    aligned block is preferred: it keeps the double-buffered v block small (budgeted
    against v7x's 64 MiB VMEM) and maximizes grid steps for megacore sharding.
    Small batches fall back to one whole-batch block (full-extent blocks are legal)."""
    unit = 8
    while (unit * n_obj) % 128 != 0 or unit * n_obj < min_lanes:
        unit += 8
        if unit > 4096:                # pathological n_obj: give up on blocking
            return batch
    if batch <= unit:
        return batch
    if 2 * unit * n_obj * v_dim * itemsize > vmem_budget:
        # Cannot shrink below the alignment unit; vmem_limit_bytes gives headroom.
        pass
    return unit


def attention_forward(v_nchw, q, params, *, mxu_dtype=jnp.float32):
    """v_nchw: [B, v_dim, 1, n_objects] (NCHW, as consumed by the module's Conv2d);
    q: [B, q_dim].
    Returns (v_weighted [B, n_glimpse*v_dim], attn_op [B, n_glimpse, 1, n_objects])."""
    w1, wq, bq, w2, b2 = params
    B, Cv, Himg, N = v_nchw.shape
    assert Himg == 1, "module's softmax reshape requires spatial height == 1"
    H = w1.shape[0]
    Cq = wq.shape[1]
    G = w2.shape[0]

    # Relayout v to [Cv, B*N]: one XLA transpose pass over v, traded for batching the
    # dominant conv_1/conv_2 matmuls across the whole block (>=4x MXU utilization).
    v_cbn = jnp.transpose(v_nchw.reshape(B, Cv, N), (1, 0, 2)).reshape(Cv, B * N)
    bq2 = bq.reshape(H, 1)
    b22 = b2.reshape(G, 1)

    if mxu_dtype != jnp.float32:
        # Opt-in bf16 MXU path (only worthwhile if v already arrives in bf16 upstream);
        # accumulation and all elementwise/softmax math stay f32 inside the kernel.
        v_cbn, q, w1, wq, w2 = (t.astype(mxu_dtype) for t in (v_cbn, q, w1, wq, w2))

    bblk = _pick_bblk(B, N, Cv, jnp.dtype(mxu_dtype).itemsize)
    nb = -(-B // bblk)                 # cdiv
    Bp = nb * bblk
    if Bp != B:                        # zero-pad the batch so every grid step is full
        v_cbn = jnp.pad(v_cbn, ((0, 0), (0, (Bp - B) * N)))
        q = jnp.pad(q, ((0, Bp - B), (0, 0)))
    lanes = bblk * N

    kernel = functools.partial(_attention_kernel, bblk=bblk, n_obj=N)

    def _weight_spec(shape):
        zeros = (0,) * len(shape)
        # Constant block index + single buffering: weights are DMA'd once and stay
        # VMEM-resident without duplicate pipeline buffers.
        return pl.BlockSpec(shape, lambda i: zeros,
                            pipeline_mode=pl.Buffered(buffer_count=1))

    vw3, logits_flat = pl.pallas_call(
        kernel,
        out_shape=(jax.ShapeDtypeStruct((Bp, G, Cv), jnp.float32),
                   jax.ShapeDtypeStruct((G, Bp * N), jnp.float32)),
        grid=(nb,),
        in_specs=[
            pl.BlockSpec((Cv, lanes), lambda i: (0, i)),
            pl.BlockSpec((bblk, Cq), lambda i: (i, 0)),
            _weight_spec((H, Cv)),
            _weight_spec((H, Cq)),
            _weight_spec((H, 1)),
            _weight_spec((G, H)),
            _weight_spec((G, 1)),
        ],
        out_specs=(
            pl.BlockSpec((bblk, G, Cv), lambda i: (i, 0, 0)),
            pl.BlockSpec((G, lanes), lambda i: (0, i)),
        ),
        # Batch blocks are independent -> shard across both TensorCores on v7x.
        # vmem_limit_bytes is sized against v7x's 64 MiB (the double-buffered v block is
        # capped at ~24 MiB by _pick_bblk, weights are single-buffered).
        compiler_params=pltpu.CompilerParams(
            dimension_semantics=("parallel",),
            vmem_limit_bytes=64 * 1024 * 1024),
    )(v_cbn, q, w1, wq, bq2, w2, b22)

    v_weighted = vw3[:B].reshape(B, G * Cv)                  # metadata-only reshape
    attn_op = jnp.transpose(logits_flat.reshape(G, Bp, N)[:, :B], (1, 0, 2))
    attn_op = attn_op.reshape(B, G, 1, N)                    # tiny (B*G*N) fixup
    return v_weighted, attn_op


def attention_ref(v_nchw, q, params):
    """Pure-JAX reference mirroring the PyTorch forward (eval mode)."""
    w1, wq, bq, w2, b2 = params
    B, Cv, _, N = v_nchw.shape
    G = w2.shape[0]
    v_a = jnp.einsum('hc,bcxn->bhxn', w1, v_nchw)
    qh = (q @ wq.T + bq)[:, :, None, None]
    x = jax.nn.relu(v_a + qh) - (v_a - qh) ** 2
    logits = jnp.einsum('gh,bhxn->bgxn', w2, x) + b2[None, :, None, None]
    attn = jax.nn.softmax(logits.reshape(-1, N), axis=1).reshape(B, G, 1, N)
    vw = jnp.einsum('bgxn,bcxn->bgc', attn, v_nchw).reshape(B, -1)
    return vw, logits


def _run_case(key, B, v_dim, q_dim, num_hid, n_glimpse, n_objects):
    kv, kq, k1, k2, k3, k4, k5 = jax.random.split(key, 7)
    v = jax.random.normal(kv, (B, v_dim, 1, n_objects), jnp.float32)
    q = jax.random.normal(kq, (B, q_dim), jnp.float32)
    # deterministic parameter init (shapes from the module __init__)
    w1 = 0.1 * jax.random.normal(k1, (num_hid, v_dim), jnp.float32)      # conv_1 [H,Cv,1,1] squeezed
    wq = 0.1 * jax.random.normal(k2, (num_hid, q_dim), jnp.float32)      # ques_linear weight
    bq = 0.1 * jax.random.normal(k3, (num_hid,), jnp.float32)            # ques_linear bias
    w2 = 0.1 * jax.random.normal(k4, (n_glimpse, num_hid), jnp.float32)  # conv_2 [G,H,1,1] squeezed
    b2 = 0.1 * jax.random.normal(k5, (n_glimpse,), jnp.float32)          # conv_2 bias
    params = (w1, wq, bq, w2, b2)

    vw, attn_op = attention_forward(v, q, params)
    jax.block_until_ready((vw, attn_op))

    vw_ref, attn_op_ref = attention_ref(v, q, params)
    assert vw.shape == (B, n_glimpse * v_dim)
    assert attn_op.shape == (B, n_glimpse, 1, n_objects)
    np.testing.assert_allclose(np.asarray(attn_op), np.asarray(attn_op_ref),
                               rtol=1e-4, atol=1e-4)
    np.testing.assert_allclose(np.asarray(vw), np.asarray(vw_ref),
                               rtol=5e-4, atol=5e-4)


if __name__ == "__main__":
    key = jax.random.PRNGKey(0)
    k0, k1 = jax.random.split(key)
    # small shapes consistent with the module (single-block path)
    _run_case(k0, B=2, v_dim=4, q_dim=8, num_hid=32, n_glimpse=2, n_objects=16)
    # multi-block + padded-batch path (grid has 2 steps -> exercises megacore sharding)
    _run_case(k1, B=20, v_dim=8, q_dim=8, num_hid=32, n_glimpse=2, n_objects=16)
    print("KERNEL_OK")
</pallas_src>

<mosaic_0001>
module attributes {stable_mosaic.version = 11 : i64} {
  func.func @_attention_kernel(%arg0: i32, %arg1: memref<4x32xf32, #tpu.memory_space<vmem>>, %arg2: memref<2x8xf32, #tpu.memory_space<vmem>>, %arg3: memref<32x4xf32, #tpu.memory_space<vmem>>, %arg4: memref<32x8xf32, #tpu.memory_space<vmem>>, %arg5: memref<32x1xf32, #tpu.memory_space<vmem>>, %arg6: memref<2x32xf32, #tpu.memory_space<vmem>>, %arg7: memref<2x1xf32, #tpu.memory_space<vmem>>, %arg8: memref<2x2x4xf32, #tpu.memory_space<vmem>>, %arg9: memref<2x32xf32, #tpu.memory_space<vmem>>) attributes {dimension_semantics = [#tpu.dimension_semantics<parallel>], iteration_bounds = array<i64: 1>, scalar_prefetch = 0 : i64, scratch_operands = 0 : i64, tpu.core_type = #tpu.core_type<tc>, window_params = [{transform_indices = @transform_0, window_bounds = array<i64: 4, 32>}, {transform_indices = @transform_1, window_bounds = array<i64: 2, 8>}, {pipeline_mode = #tpu.pipeline_mode<synchronous>, transform_indices = @transform_2, window_bounds = array<i64: 32, 4>}, {pipeline_mode = #tpu.pipeline_mode<synchronous>, transform_indices = @transform_3, window_bounds = array<i64: 32, 8>}, {pipeline_mode = #tpu.pipeline_mode<synchronous>, transform_indices = @transform_4, window_bounds = array<i64: 32, 1>}, {pipeline_mode = #tpu.pipeline_mode<synchronous>, transform_indices = @transform_5, window_bounds = array<i64: 2, 32>}, {pipeline_mode = #tpu.pipeline_mode<synchronous>, transform_indices = @transform_6, window_bounds = array<i64: 2, 1>}, {transform_indices = @transform_7, window_bounds = array<i64: 2, 2, 4>}, {transform_indices = @transform_8, window_bounds = array<i64: 2, 32>}]} {
    %c0 = arith.constant 0 : index
    %c0_0 = arith.constant 0 : index
    %0 = vector.load %arg4[%c0, %c0_0] : memref<32x8xf32, #tpu.memory_space<vmem>>, vector<32x8xf32>
    %c0_1 = arith.constant 0 : index
    %c0_2 = arith.constant 0 : index
    %1 = vector.load %arg2[%c0_1, %c0_2] : memref<2x8xf32, #tpu.memory_space<vmem>>, vector<2x8xf32>
    %cst = arith.constant dense<0.000000e+00> : vector<32x2xf32>
    %2 = tpu.matmul %0, %1, %cst {dimension_numbers = #tpu.dot_dimension_numbers<[1], [1], [0], [0], [0, 0, 1, 0], [], []>} : vector<32x8xf32>, vector<2x8xf32>, vector<32x2xf32> -> vector<32x2xf32>
    %c0_3 = arith.constant 0 : index
    %c0_4 = arith.constant 0 : index
    %3 = vector.load %arg5[%c0_3, %c0_4] : memref<32x1xf32, #tpu.memory_space<vmem>>, vector<32x1xf32>
    %4 = vector.broadcast %3 : vector<32x1xf32> to vector<32x2xf32>
    %5 = arith.addf %2, %4 : vector<32x2xf32>
    %6 = tpu.iota {dimensions = array<i32: 1>} : vector<2x32xi32>
    %7 = tpu.iota {dimensions = array<i32: 0>} : vector<2x32xi32>
    %c16_i32 = arith.constant 16 : i32
    %8 = vector.broadcast %c16_i32 : i32 to vector<2x32xi32>
    %9 = arith.muli %7, %8 : vector<2x32xi32>
    %10 = arith.cmpi sge, %6, %9 : vector<2x32xi32>
    %c1_i32 = arith.constant 1 : i32
    %11 = vector.broadcast %c1_i32 : i32 to vector<2x32xi32>
    %12 = arith.addi %7, %11 : vector<2x32xi32>
    %c16_i32_5 = arith.constant 16 : i32
    %13 = vector.broadcast %c16_i32_5 : i32 to vector<2x32xi32>
    %14 = arith.muli %12, %13 : vector<2x32xi32>
    %15 = arith.cmpi slt, %6, %14 : vector<2x32xi32>
    %16 = arith.andi %10, %15 : vector<2x32xi1>
    %17 = arith.extui %16 : vector<2x32xi1> to vector<2x32xi32>
    %18 = arith.sitofp %17 : vector<2x32xi32> to vector<2x32xf32>
    %cst_6 = arith.constant dense<0.000000e+00> : vector<32x32xf32>
    %19 = tpu.matmul %5, %18, %cst_6 {dimension_numbers = #tpu.dot_dimension_numbers<[1], [0], [0], [1], [0, 0, 1, 1], [], []>} : vector<32x2xf32>, vector<2x32xf32>, vector<32x32xf32> -> vector<32x32xf32>
    %c0_7 = arith.constant 0 : index
    %c0_8 = arith.constant 0 : index
    %20 = vector.load %arg3[%c0_7, %c0_8] : memref<32x4xf32, #tpu.memory_space<vmem>>, vector<32x4xf32>
    %c0_9 = arith.constant 0 : index
    %c0_10 = arith.constant 0 : index
    %21 = vector.load %arg1[%c0_9, %c0_10] : memref<4x32xf32, #tpu.memory_space<vmem>>, vector<4x32xf32>
    %cst_11 = arith.constant dense<0.000000e+00> : vector<32x32xf32>
    %22 = tpu.matmul %20, %21, %cst_11 {dimension_numbers = #tpu.dot_dimension_numbers<[1], [0], [0], [1], [0, 0, 1, 1], [], []>} : vector<32x4xf32>, vector<4x32xf32>, vector<32x32xf32> -> vector<32x32xf32>
    %23 = arith.addf %22, %19 : vector<32x32xf32>
    %cst_12 = arith.constant 0.000000e+00 : f32
    %24 = vector.broadcast %cst_12 : f32 to vector<32x32xf32>
    %25 = arith.maximumf %23, %24 : vector<32x32xf32>
    %26 = arith.subf %22, %19 : vector<32x32xf32>
    %27 = arith.mulf %26, %26 : vector<32x32xf32>
    %28 = arith.subf %25, %27 : vector<32x32xf32>
    %c0_13 = arith.constant 0 : index
    %c0_14 = arith.constant 0 : index
    %29 = vector.load %arg6[%c0_13, %c0_14] : memref<2x32xf32, #tpu.memory_space<vmem>>, vector<2x32xf32>
    %cst_15 = arith.constant dense<0.000000e+00> : vector<2x32xf32>
    %30 = tpu.matmul %29, %28, %cst_15 {dimension_numbers = #tpu.dot_dimension_numbers<[1], [0], [0], [1], [0, 0, 1, 1], [], []>} : vector<2x32xf32>, vector<32x32xf32>, vector<2x32xf32> -> vector<2x32xf32>
    %c0_16 = arith.constant 0 : index
    %c0_17 = arith.constant 0 : index
    %31 = vector.load %arg7[%c0_16, %c0_17] : memref<2x1xf32, #tpu.memory_space<vmem>>, vector<2x1xf32>
    %32 = vector.broadcast %31 : vector<2x1xf32> to vector<2x32xf32>
    %33 = arith.addf %30, %32 : vector<2x32xf32>
    %c0_18 = arith.constant 0 : index
    %c0_19 = arith.constant 0 : index
    %34 = vector.load %arg9[%c0_18, %c0_19] : memref<2x32xf32, #tpu.memory_space<vmem>>, vector<2x32xf32>
    tpu.vector_store %arg9[%c0_18, %c0_19], %33 {strides = array<i32>} : memref<2x32xf32, #tpu.memory_space<vmem>>, vector<2x32xf32>,
    %35 = vector.extract_strided_slice %33 {offsets = [0, 0], sizes = [2, 16], strides = [1, 1]} : vector<2x32xf32> to vector<2x16xf32>
    %cst_20 = arith.constant dense<0xFF800000> : vector<2xf32>
    %36 = vector.multi_reduction <maximumf>, %35, %cst_20 [1] : vector<2x16xf32> to vector<2xf32>
    %37 = vector.shape_cast %36 : vector<2xf32> to vector<2x1xf32>
    %38 = vector.broadcast %37 : vector<2x1xf32> to vector<2x16xf32>
    %39 = arith.subf %35, %38 : vector<2x16xf32>
    %40 = math.exp %39 : vector<2x16xf32>
    %cst_21 = arith.constant dense<0.000000e+00> : vector<2xf32>
    %41 = vector.multi_reduction <add>, %40, %cst_21 [1] : vector<2x16xf32> to vector<2xf32>
    %42 = vector.shape_cast %41 : vector<2xf32> to vector<2x1xf32>
    %43 = vector.broadcast %42 : vector<2x1xf32> to vector<2x16xf32>
    %44 = arith.divf %40, %43 : vector<2x16xf32>
    %c0_22 = arith.constant 0 : index
    %c0_23 = arith.constant 0 : index
    %45 = vector.load %arg1[%c0_22, %c0_23] : memref<4x32xf32, #tpu.memory_space<vmem>>, vector<4x16xf32>
    %cst_24 = arith.constant dense<0.000000e+00> : vector<2x4xf32>
    %46 = tpu.matmul %44, %45, %cst_24 {dimension_numbers = #tpu.dot_dimension_numbers<[1], [1], [0], [0], [0, 0, 1, 0], [], []>} : vector<2x16xf32>, vector<4x16xf32>, vector<2x4xf32> -> vector<2x4xf32>
    %c0_25 = arith.constant 0 : index
    %c0_26 = arith.constant 0 : index
    %c0_27 = arith.constant 0 : index
    %47 = vector.load %arg8[%c0_25, %c0_26, %c0_27] : memref<2x2x4xf32, #tpu.memory_space<vmem>>, vector<1x2x4xf32>
    %48 = vector.shape_cast %47 : vector<1x2x4xf32> to vector<2x4xf32>
    %49 = vector.shape_cast %46 : vector<2x4xf32> to vector<1x2x4xf32>
    tpu.vector_store %arg8[%c0_25, %c0_26, %c0_27], %49 {strides = array<i32>} : memref<2x2x4xf32, #tpu.memory_space<vmem>>, vector<1x2x4xf32>,
    %50 = vector.extract_strided_slice %33 {offsets = [0, 16], sizes = [2, 16], strides = [1, 1]} : vector<2x32xf32> to vector<2x16xf32>
    %cst_28 = arith.constant dense<0xFF800000> : vector<2xf32>
    %51 = vector.multi_reduction <maximumf>, %50, %cst_28 [1] : vector<2x16xf32> to vector<2xf32>
    %52 = vector.shape_cast %51 : vector<2xf32> to vector<2x1xf32>
    %53 = vector.broadcast %52 : vector<2x1xf32> to vector<2x16xf32>
    %54 = arith.subf %50, %53 : vector<2x16xf32>
    %55 = math.exp %54 : vector<2x16xf32>
    %cst_29 = arith.constant dense<0.000000e+00> : vector<2xf32>
    %56 = vector.multi_reduction <add>, %55, %cst_29 [1] : vector<2x16xf32> to vector<2xf32>
    %57 = vector.shape_cast %56 : vector<2xf32> to vector<2x1xf32>
    %58 = vector.broadcast %57 : vector<2x1xf32> to vector<2x16xf32>
    %59 = arith.divf %55, %58 : vector<2x16xf32>
    %c0_30 = arith.constant 0 : index
    %c16 = arith.constant 16 : index
    %60 = vector.load %arg1[%c0_30, %c16] : memref<4x32xf32, #tpu.memory_space<vmem>>, vector<4x16xf32>
    %cst_31 = arith.constant dense<0.000000e+00> : vector<2x4xf32>
    %61 = tpu.matmul %59, %60, %cst_31 {dimension_numbers = #tpu.dot_dimension_numbers<[1], [1], [0], [0], [0, 0, 1, 0], [], []>} : vector<2x16xf32>, vector<4x16xf32>, vector<2x4xf32> -> vector<2x4xf32>
    %c1 = arith.constant 1 : index
    %c0_32 = arith.constant 0 : index
    %c0_33 = arith.constant 0 : index
    %62 = vector.load %arg8[%c1, %c0_32, %c0_33] : memref<2x2x4xf32, #tpu.memory_space<vmem>>, vector<1x2x4xf32>
    %63 = vector.shape_cast %62 : vector<1x2x4xf32> to vector<2x4xf32>
    %64 = vector.shape_cast %61 : vector<2x4xf32> to vector<1x2x4xf32>
    tpu.vector_store %arg8[%c1, %c0_32, %c0_33], %64 {strides = array<i32>} : memref<2x2x4xf32, #tpu.memory_space<vmem>>, vector<1x2x4xf32>,
    return
  }
  func.func @transform_0(%arg0: i32) -> (i32, i32) {
    %c0_i32 = arith.constant 0 : i32
    %c0_i32_0 = arith.constant 0 : i32
    return %c0_i32, %arg0 : i32, i32
  }
  func.func @transform_1(%arg0: i32) -> (i32, i32) {
    %c0_i32 = arith.constant 0 : i32
    %c0_i32_0 = arith.constant 0 : i32
    return %arg0, %c0_i32 : i32, i32
  }
  func.func @transform_2(%arg0: i32) -> (i32, i32) {
    %c0_i32 = arith.constant 0 : i32
    %c0_i32_0 = arith.constant 0 : i32
    %c0_i32_1 = arith.constant 0 : i32
    return %c0_i32, %c0_i32_0 : i32, i32
  }
  func.func @transform_3(%arg0: i32) -> (i32, i32) {
    %c0_i32 = arith.constant 0 : i32
    %c0_i32_0 = arith.constant 0 : i32
    %c0_i32_1 = arith.constant 0 : i32
    return %c0_i32, %c0_i32_0 : i32, i32
  }
  func.func @transform_4(%arg0: i32) -> (i32, i32) {
    %c0_i32 = arith.constant 0 : i32
    %c0_i32_0 = arith.constant 0 : i32
    %c0_i32_1 = arith.constant 0 : i32
    return %c0_i32, %c0_i32_0 : i32, i32
  }
  func.func @transform_5(%arg0: i32) -> (i32, i32) {
    %c0_i32 = arith.constant 0 : i32
    %c0_i32_0 = arith.constant 0 : i32
    %c0_i32_1 = arith.constant 0 : i32
    return %c0_i32, %c0_i32_0 : i32, i32
  }
  func.func @transform_6(%arg0: i32) -> (i32, i32) {
    %c0_i32 = arith.constant 0 : i32
    %c0_i32_0 = arith.constant 0 : i32
    %c0_i32_1 = arith.constant 0 : i32
    return %c0_i32, %c0_i32_0 : i32, i32
  }
  func.func @transform_7(%arg0: i32) -> (i32, i32, i32) {
    %c0_i32 = arith.constant 0 : i32
    %c0_i32_0 = arith.constant 0 : i32
    %c0_i32_1 = arith.constant 0 : i32
    return %arg0, %c0_i32, %c0_i32_0 : i32, i32, i32
  }
  func.func @transform_8(%arg0: i32) -> (i32, i32) {
    %c0_i32 = arith.constant 0 : i32
    %c0_i32_0 = arith.constant 0 : i32
    return %c0_i32, %arg0 : i32, i32
  }
}

</mosaic_0001>

<llo_original>
// kernel: tpu_custom_call.1
$region0: #{tpu_custom_call.1}
  #allocation0 [shape = 'u32[]', space=smem, size = 0x4, offset = 0x4, fixed_abs, tag = 'smem constant byte address 0x4 - core index']
  #allocation1 [shape = 'u32[144,128]{1,0:T(1,128)}', space=vmem, size = 0x12000, scoped, tag = 'internal scratch']
  %s0 = inlined_call_operand.hbm [shape: f32[4,32], index: 0, kind: input, shape index: {}]
  %s1 = inlined_call_operand.hbm [shape: f32[2,8], index: 1, kind: input, shape index: {}]
  %s2 = inlined_call_operand.hbm [shape: f32[32,4], index: 2, kind: input, shape index: {}]
  %s3 = inlined_call_operand.hbm [shape: f32[32,8], index: 3, kind: input, shape index: {}]
  %s4 = inlined_call_operand.hbm [shape: f32[32,1], index: 4, kind: input, shape index: {}]
  %s5 = inlined_call_operand.hbm [shape: f32[2,32], index: 5, kind: input, shape index: {}]
  %s6 = inlined_call_operand.hbm [shape: f32[2,1], index: 6, kind: input, shape index: {}]
  %s7 = inlined_call_operand.hbm [shape: f32[2,2,4], index: 7, kind: output, shape index: {0}]
  %s8 = inlined_call_operand.hbm [shape: f32[2,32], index: 8, kind: output, shape index: {1}]
  %9 = xla_tuple %s7, %s8
  %s10 = sld [smem:[#allocation0]]
  $region74: #{tpu_custom_call.1} parent=0
    _
  %s12 = ssub.s32 1, %s10
  %s13 = scalar_select 0, %s12, %s10
  $region1: #{tpu_custom_call.1} parent=0
    #allocation2 [shape = 'u8[2048]{0}', space=vmem, size = 0x800, scoped, tag = 'input window, operand 0, single buffered']
    #allocation3 [shape = 's32[1]{0}', space=sflag, size = 0x4, scoped, tag = 'scoped memory for tpu_custom_call.1']
    #allocation4 [shape = 's32[1]{0}', space=sflag, size = 0x4, scoped, tag = 'scoped memory for tpu_custom_call.1']
    #allocation5 [shape = 'u8[1024]{0}', space=vmem, size = 0x400, scoped, tag = 'input window, operand 1, single buffered']
    #allocation6 [shape = 's32[1]{0}', space=sflag, size = 0x4, scoped, tag = 'scoped memory for tpu_custom_call.1']
    #allocation7 [shape = 'u8[16384]{0}', space=vmem, size = 0x4000, scoped, tag = 'input window, operand 2, single buffered']
    #allocation8 [shape = 'u8[16384]{0}', space=vmem, size = 0x4000, scoped, tag = 'input window, operand 3, single buffered']
    #allocation9 [shape = 's32[1]{0}', space=sflag, size = 0x4, scoped, tag = 'scoped memory for tpu_custom_call.1']
    #allocation10 [shape = 'u8[16384]{0}', space=vmem, size = 0x4000, scoped, tag = 'input window, operand 4, single buffered']
    #allocation11 [shape = 'u8[1024]{0}', space=vmem, size = 0x400, scoped, tag = 'input window, operand 5, single buffered']
    #allocation12 [shape = 's32[1]{0}', space=sflag, size = 0x4, scoped, tag = 'scoped memory for tpu_custom_call.1']
    #allocation13 [shape = 'u8[1024]{0}', space=vmem, size = 0x400, scoped, tag = 'input window, operand 6, single buffered']
    #allocation14 [shape = 'u8[2048]{0}', space=vmem, size = 0x800, scoped, tag = 'output window, operand 0, single buffered']
    #allocation15 [shape = 'u8[1024]{0}', space=vmem, size = 0x400, scoped, tag = 'output window, operand 1, single buffered']
    #allocation16 [shape = 's32[1]{0}', space=sflag, size = 0x4, scoped, tag = 'scoped memory for tpu_custom_call.1']
    %14 = vsyncpa [#allocation3], 0
    %15 = vsyncpa [#allocation6], 0
    %16 = vsyncpa [#allocation9], 0
    %17 = vsyncpa [#allocation12], 0
    %18 = vsyncpa [#allocation4], 0
    %19 = vsyncpa [#allocation16], 0
    // Predicated region
    $region2: #{tpu_custom_call.1} parent=1 // pred_check
      _
    $region3: #{tpu_custom_call.1} parent=1 // pred_check_branch
      %21 = sbr.rel (0) target = $region5
    $region4: #{tpu_custom_call.1} parent=1 // pred_region
      %s23 = ssub.s32 64, 64
      %24 = vsyncadd [#allocation3], %s23
      %s26 = sshll.u32 [#allocation2], 4
      %s27 = int_to_ptr.vmem [resolvable:$true] %s26
      %29 = dma.hbm_to_vmem [thread:$0]  %s0, 64, %s27, [#allocation3]
    $region5: #{tpu_custom_call.1} parent=1 // pred_fallthru
      _
    // Predicated region
    $region6: #{tpu_custom_call.1} parent=1 // pred_check
      _
    $region7: #{tpu_custom_call.1} parent=1 // pred_check_branch
      %31 = sbr.rel (0) target = $region9
    $region8: #{tpu_custom_call.1} parent=1 // pred_region
      %s33 = ssub.s32 32, 32
      %34 = vsyncadd [#allocation6], %s33
      %s36 = sshll.u32 [#allocation5], 4
      %s37 = int_to_ptr.vmem [resolvable:$true] %s36
      %39 = dma.hbm_to_vmem [thread:$0]  %s1, 32, %s37, [#allocation6]
    $region9: #{tpu_custom_call.1} parent=1 // pred_fallthru
      _
    // Predicated region
    $region10: #{tpu_custom_call.1} parent=1 // pred_check
      _
    $region11: #{tpu_custom_call.1} parent=1 // pred_check_branch
      %41 = sbr.rel (0) target = $region13
    $region12: #{tpu_custom_call.1} parent=1 // pred_region
      %s43 = ssub.s32 512, 512
      %44 = vsyncadd [#allocation6], %s43
      %s45 = sshll.u32 [#allocation7], 4
      %s46 = int_to_ptr.vmem [resolvable:$true] %s45
      %51 = dma.hbm_to_vmem [thread:$0]  %s2, 512, %s46, [#allocation6], 128, 128, 8
    $region13: #{tpu_custom_call.1} parent=1 // pred_fallthru
      _
    // Predicated region
    $region14: #{tpu_custom_call.1} parent=1 // pred_check
      _
    $region15: #{tpu_custom_call.1} parent=1 // pred_check_branch
      %53 = sbr.rel (0) target = $region17
    $region16: #{tpu_custom_call.1} parent=1 // pred_region
      %s55 = ssub.s32 512, 512
      %56 = vsyncadd [#allocation9], %s55
      %s57 = sshll.u32 [#allocation8], 4
      %s58 = int_to_ptr.vmem [resolvable:$true] %s57
      %63 = dma.hbm_to_vmem [thread:$0]  %s3, 512, %s58, [#allocation9], 128, 128, 8
    $region17: #{tpu_custom_call.1} parent=1 // pred_fallthru
      _
    // Predicated region
    $region18: #{tpu_custom_call.1} parent=1 // pred_check
      _
    $region19: #{tpu_custom_call.1} parent=1 // pred_check_branch
      %65 = sbr.rel (0) target = $region21
    $region20: #{tpu_custom_call.1} parent=1 // pred_region
      %s67 = ssub.s32 512, 512
      %68 = vsyncadd [#allocation9], %s67
      %s69 = sshll.u32 [#allocation10], 4
      %s70 = int_to_ptr.vmem [resolvable:$true] %s69
      %75 = dma.hbm_to_vmem [thread:$0]  %s4, 512, %s70, [#allocation9], 128, 128, 8
    $region21: #{tpu_custom_call.1} parent=1 // pred_fallthru
      _
    // Predicated region
    $region22: #{tpu_custom_call.1} parent=1 // pred_check
      _
    $region23: #{tpu_custom_call.1} parent=1 // pred_check_branch
      %77 = sbr.rel (0) target = $region25
    $region24: #{tpu_custom_call.1} parent=1 // pred_region
      %s79 = ssub.s32 32, 32
      %80 = vsyncadd [#allocation12], %s79
      %s82 = sshll.u32 [#allocation11], 4
      %s83 = int_to_ptr.vmem [resolvable:$true] %s82
      %85 = dma.hbm_to_vmem [thread:$0]  %s5, 32, %s83, [#allocation12]
    $region25: #{tpu_custom_call.1} parent=1 // pred_fallthru
      _
    // Predicated region
    $region26: #{tpu_custom_call.1} parent=1 // pred_check
      _
    $region27: #{tpu_custom_call.1} parent=1 // pred_check_branch
      %87 = sbr.rel (0) target = $region29
    $region28: #{tpu_custom_call.1} parent=1 // pred_region
      %s89 = ssub.s32 32, 32
      %90 = vsyncadd [#allocation12], %s89
      %s92 = sshll.u32 [#allocation13], 4
      %s93 = int_to_ptr.vmem [resolvable:$true] %s92
      %95 = dma.hbm_to_vmem [thread:$0]  %s6, 32, %s93, [#allocation12]
    $region29: #{tpu_custom_call.1} parent=1 // pred_fallthru
      _
    // Predicated region
    $region30: #{tpu_custom_call.1} parent=1 // pred_check
      _
    $region31: #{tpu_custom_call.1} parent=1 // pred_check_branch
      %97 = sbr.rel (0) target = $region33
    $region32: #{tpu_custom_call.1} parent=1 // pred_region
      %98 = dma.done [#allocation3], 64
    $region33: #{tpu_custom_call.1} parent=1 // pred_fallthru
      _
    // Predicated region
    $region34: #{tpu_custom_call.1} parent=1 // pred_check
      _
    $region35: #{tpu_custom_call.1} parent=1 // pred_check_branch
      %100 = sbr.rel (0) target = $region37
    $region36: #{tpu_custom_call.1} parent=1 // pred_region
      %101 = dma.done [#allocation6], 32
    $region37: #{tpu_custom_call.1} parent=1 // pred_fallthru
      _
    // Predicated region
    $region38: #{tpu_custom_call.1} parent=1 // pred_check
      _
    $region39: #{tpu_custom_call.1} parent=1 // pred_check_branch
      %103 = sbr.rel (0) target = $region41
    $region40: #{tpu_custom_call.1} parent=1 // pred_region
      %104 = dma.done [#allocation6], 512
    $region41: #{tpu_custom_call.1} parent=1 // pred_fallthru
      _
    // Predicated region
    $region42: #{tpu_custom_call.1} parent=1 // pred_check
      _
    $region43: #{tpu_custom_call.1} parent=1 // pred_check_branch
      %106 = sbr.rel (0) target = $region45
    $region44: #{tpu_custom_call.1} parent=1 // pred_region
      %107 = dma.done [#allocation9], 512
    $region45: #{tpu_custom_call.1} parent=1 // pred_fallthru
      _
    // Predicated region
    $region46: #{tpu_custom_call.1} parent=1 // pred_check
      _
    $region47: #{tpu_custom_call.1} parent=1 // pred_check_branch
      %109 = sbr.rel (0) target = $region49
    $region48: #{tpu_custom_call.1} parent=1 // pred_region
      %110 = dma.done [#allocation9], 512
    $region49: #{tpu_custom_call.1} parent=1 // pred_fallthru
      _
    // Predicated region
    $region50: #{tpu_custom_call.1} parent=1 // pred_check
      _
    $region51: #{tpu_custom_call.1} parent=1 // pred_check_branch
      %112 = sbr.rel (0) target = $region53
    $region52: #{tpu_custom_call.1} parent=1 // pred_region
      %113 = dma.done [#allocation12], 32
    $region53: #{tpu_custom_call.1} parent=1 // pred_fallthru
      _
    // Predicated region
    $region54: #{tpu_custom_call.1} parent=1 // pred_check
      _
    $region55: #{tpu_custom_call.1} parent=1 // pred_check_branch
      %115 = sbr.rel (0) target = $region57
    $region56: #{tpu_custom_call.1} parent=1 // pred_region
      %116 = dma.done [#allocation12], 32
    $region57: #{tpu_custom_call.1} parent=1 // pred_fallthru
      _
    %v117 = vld [vmem:[#allocation8] sm:$0xff]
    %v118 = vld [vmem:[#allocation8 + $0x8] sm:$0xff]
    %v119 = vld [vmem:[#allocation8 + $0x10] sm:$0xff]
    %v120 = vld [vmem:[#allocation8 + $0x18] sm:$0xff]
    %v121 = vld [vmem:[#allocation5] sm:$0x3]
    %v122 = vld [vmem:[#allocation10] sm:$0xff]
    %v123 = vld [vmem:[#allocation10 + $0x8] sm:$0xff]
    %v124 = vld [vmem:[#allocation10 + $0x10] sm:$0xff]
    %v125 = vld [vmem:[#allocation10 + $0x18] sm:$0xff]
    %127 = vset.pattern.permute.xlu0 0
    %128 = vperm.xlu0 %127, %v122
    %v129 = vpop.permute.xlu0 %128
    %132 = vset.pattern.permute.xlu0 0
    %133 = vperm.xlu0 %132, %v123
    %v134 = vpop.permute.xlu0 %133
    %137 = vset.pattern.permute.xlu0 0
    %138 = vperm.xlu0 %137, %v124
    %v139 = vpop.permute.xlu0 %138
    %142 = vset.pattern.permute.xlu0 0
    %143 = vperm.xlu0 %142, %v125
    %v144 = vpop.permute.xlu0 %143
    %vm146 = vcmask 64512
    %v148 = vsel %vm146, %v117, 0
    %v151 = vsel %vm146, %v118, 0
    %v154 = vsel %vm146, %v119, 0
    %v157 = vsel %vm146, %v120, 0
    %v160 = vsel %vm146, %v121, 0
    %162 = vmatprep.subr.mxu0 0.0
    %163 = vmatpush1.xpose.msra.mxu0 %v160
    %164 = vmatprep.subr.mxu0 0.0
    %165 = vmatpush1.xpose.msra.mxu0 0.0
    %166 = vmatprep.subr.mxu0 0.0
    %167 = vmatpush1.xpose.msra.mxu0 0.0
    %168 = vmatprep.subr.mxu0 0.0
    %169 = vmatpush1.xpose.msra.mxu0 0.0
    %170 = vmatprep.subr.mxu0 0.0
    %171 = vmatpush1.xpose.msra.mxu0 0.0
    %172 = vmatprep.subr.mxu0 0.0
    %173 = vmatpush1.xpose.msra.mxu0 0.0
    %174 = vmatprep.subr.mxu0 0.0
    %175 = vmatpush1.xpose.msra.mxu0 0.0
    %176 = vmatprep.subr.mxu0 0.0
    %177 = vmatpush1.xpose.msra.mxu0 0.0
    %178 = vmatprep.subr.mxu0 0.0
    %179 = vmatpush1.xpose.msra.mxu0 0.0
    %180 = vmatprep.subr.mxu0 0.0
    %181 = vmatpush1.xpose.msra.mxu0 0.0
    %182 = vmatprep.subr.mxu0 0.0
    %183 = vmatpush1.xpose.msra.mxu0 0.0
    %184 = vmatprep.subr.mxu0 0.0
    %185 = vmatpush1.xpose.msra.mxu0 0.0
    %186 = vmatprep.subr.mxu0 0.0
    %187 = vmatpush1.xpose.msra.mxu0 0.0
    %188 = vmatprep.subr.mxu0 0.0
    %189 = vmatpush1.xpose.msra.mxu0 0.0
    %190 = vmatprep.subr.mxu0 0.0
    %191 = vmatpush1.xpose.msra.mxu0 0.0
    %192 = vmatprep.subr.mxu0 0.0
    %193 = vmatpush1.xpose.msra.mxu0 0.0
    %194 = vmatprep.subr.mxu0 0.0
    %195 = vmatpush1.xpose.msra.mxu0 0.0
    %196 = vmatprep.subr.mxu0 0.0
    %197 = vmatpush1.xpose.msra.mxu0 0.0
    %198 = vmatprep.subr.mxu0 0.0
    %199 = vmatpush1.xpose.msra.mxu0 0.0
    %200 = vmatprep.subr.mxu0 0.0
    %201 = vmatpush1.xpose.msra.mxu0 0.0
    %202 = vmatprep.subr.mxu0 0.0
    %203 = vmatpush1.xpose.msra.mxu0 0.0
    %204 = vmatprep.subr.mxu0 0.0
    %205 = vmatpush1.xpose.msra.mxu0 0.0
    %206 = vmatprep.subr.mxu0 0.0
    %207 = vmatpush1.xpose.msra.mxu0 0.0
    %208 = vmatprep.subr.mxu0 0.0
    %209 = vmatpush1.xpose.msra.mxu0 0.0
    %210 = vmatprep.subr.mxu0 0.0
    %211 = vmatpush1.xpose.msra.mxu0 0.0
    %212 = vmatprep.subr.mxu0 0.0
    %213 = vmatpush1.xpose.msra.mxu0 0.0
    %214 = vmatprep.subr.mxu0 0.0
    %215 = vmatpush1.xpose.msra.mxu0 0.0
    %216 = vmatprep.subr.mxu0 0.0
    %217 = vmatpush1.xpose.msra.mxu0 0.0
    %218 = vmatprep.subr.mxu0 0.0
    %219 = vmatpush1.xpose.msra.mxu0 0.0
    %220 = vmatprep.subr.mxu0 0.0
    %221 = vmatpush1.xpose.msra.mxu0 0.0
    %222 = vmatprep.subr.mxu0 0.0
    %223 = vmatpush1.xpose.msra.mxu0 0.0
    %224 = vmatprep.subr.mxu0 0.0
    %225 = vmatpush1.xpose.msra.mxu0 0.0
    %226 = vmatprep.mubr.f32.mxu0 0.0
    %227 = vmatmul.mubr.f32.gmra.mrb[0].mxu0 %v148
    %v228 = vpop.f32.mrb[0].mxu0
    %v229 = vadd.f32 %v129, %v228
    %v230 = vpop.f32.mrb[0].mxu0
    %231 = vmatprep.mubr.f32.mxu0 0.0
    %232 = vmatmul.mubr.f32.gmra.mrb[0].mxu0 %v151
    %v233 = vpop.f32.mrb[0].mxu0
    %v234 = vadd.f32 %v134, %v233
    %v235 = vpop.f32.mrb[0].mxu0
    %236 = vmatprep.mubr.f32.mxu0 0.0
    %237 = vmatmul.mubr.f32.gmra.mrb[0].mxu0 %v154
    %v238 = vpop.f32.mrb[0].mxu0
    %v239 = vadd.f32 %v139, %v238
    %v240 = vpop.f32.mrb[0].mxu0
    %241 = vmatprep.mubr.f32.mxu0 0.0
    %242 = vmatmul.mubr.f32.gmra.mrb[0].mxu0 %v157
    %v243 = vpop.f32.mrb[0].mxu0
    %v244 = vadd.f32 %v144, %v243
    %v245 = vpop.f32.mrb[0].mxu0
    %246 = vdwg.mxu0
    %v247 = vlaneseq
    %v248 = vand.u32 %v247, 127
    %v249 = vlaneseq
    %v250 = vshrl.u32 %v249, 7
    %v251 = vmul.u32 %v250, 16
    %vm252 = vcmp.ge.s32.totalorder %v248, %v251
    %v253 = vadd.s32 %v250, 1
    %v254 = vmul.u32 %v253, 16
    %vm255 = vcmp.lt.s32.totalorder %v248, %v254
    %vm256 = vmand %vm252, %vm255
    %v257 = vsel %vm256, 1, 0
    %v258 = vcvt.s32.f32 %v257
    %vm259 = vcmask 15360
    %v261 = vsel %vm259, %v229, 0
    %v264 = vsel %vm259, %v234, 0
    %v267 = vsel %vm259, %v239, 0
    %v270 = vsel %vm259, %v244, 0
    %vm272 = vcmask 1041408
    %v274 = vsel %vm272, %v258, 0
    %276 = vmatprep.subr.mxu0 0.0
    %277 = vmatpush1.msra.mxu0 %v274
    %278 = vmatprep.subr.mxu0 0.0
    %279 = vmatpush1.msra.mxu0 0.0
    %280 = vmatprep.subr.mxu0 0.0
    %281 = vmatpush1.msra.mxu0 0.0
    %282 = vmatprep.subr.mxu0 0.0
    %283 = vmatpush1.msra.mxu0 0.0
    %284 = vmatprep.subr.mxu0 0.0
    %285 = vmatpush1.msra.mxu0 0.0
    %286 = vmatprep.subr.mxu0 0.0
    %287 = vmatpush1.msra.mxu0 0.0
    %288 = vmatprep.subr.mxu0 0.0
    %289 = vmatpush1.msra.mxu0 0.0
    %290 = vmatprep.subr.mxu0 0.0
    %291 = vmatpush1.msra.mxu0 0.0
    %292 = vmatprep.subr.mxu0 0.0
    %293 = vmatpush1.msra.mxu0 0.0
    %294 = vmatprep.subr.mxu0 0.0
    %295 = vmatpush1.msra.mxu0 0.0
    %296 = vmatprep.subr.mxu0 0.0
    %297 = vmatpush1.msra.mxu0 0.0
    %298 = vmatprep.subr.mxu0 0.0
    %299 = vmatpush1.msra.mxu0 0.0
    %300 = vmatprep.subr.mxu0 0.0
    %301 = vmatpush1.msra.mxu0 0.0
    %302 = vmatprep.subr.mxu0 0.0
    %303 = vmatpush1.msra.mxu0 0.0
    %304 = vmatprep.subr.mxu0 0.0
    %305 = vmatpush1.msra.mxu0 0.0
    %306 = vmatprep.subr.mxu0 0.0
    %307 = vmatpush1.msra.mxu0 0.0
    %308 = vmatprep.subr.mxu0 0.0
    %309 = vmatpush1.msra.mxu0 0.0
    %310 = vmatprep.subr.mxu0 0.0
    %311 = vmatpush1.msra.mxu0 0.0
    %312 = vmatprep.subr.mxu0 0.0
    %313 = vmatpush1.msra.mxu0 0.0
    %314 = vmatprep.subr.mxu0 0.0
    %315 = vmatpush1.msra.mxu0 0.0
    %316 = vmatprep.subr.mxu0 0.0
    %317 = vmatpush1.msra.mxu0 0.0
    %318 = vmatprep.subr.mxu0 0.0
    %319 = vmatpush1.msra.mxu0 0.0
    %320 = vmatprep.subr.mxu0 0.0
    %321 = vmatpush1.msra.mxu0 0.0
    %322 = vmatprep.subr.mxu0 0.0
    %323 = vmatpush1.msra.mxu0 0.0
    %324 = vmatprep.subr.mxu0 0.0
    %325 = vmatpush1.msra.mxu0 0.0
    %326 = vmatprep.subr.mxu0 0.0
    %327 = vmatpush1.msra.mxu0 0.0
    %328 = vmatprep.subr.mxu0 0.0
    %329 = vmatpush1.msra.mxu0 0.0
    %330 = vmatprep.subr.mxu0 0.0
    %331 = vmatpush1.msra.mxu0 0.0
    %332 = vmatprep.subr.mxu0 0.0
    %333 = vmatpush1.msra.mxu0 0.0
    %334 = vmatprep.subr.mxu0 0.0
    %335 = vmatpush1.msra.mxu0 0.0
    %336 = vmatprep.subr.mxu0 0.0
    %337 = vmatpush1.msra.mxu0 0.0
    %338 = vmatprep.subr.mxu0 0.0
    %339 = vmatpush1.msra.mxu0 0.0
    %340 = vmatprep.mubr.f32.mxu0 0.0
    %341 = vmatmul.mubr.f32.gmra.mrb[0].mxu0 %v261
    %v342 = vpop.f32.mrb[0].mxu0
    %v343 = vadd.f32 0.0, %v342
    %v344 = vpop.f32.mrb[0].mxu0
    %345 = vmatprep.mubr.f32.mxu0 0.0
    %346 = vmatmul.mubr.f32.gmra.mrb[0].mxu0 %v264
    %v347 = vpop.f32.mrb[0].mxu0
    %v348 = vadd.f32 0.0, %v347
    %v349 = vpop.f32.mrb[0].mxu0
    %350 = vmatprep.mubr.f32.mxu0 0.0
    %351 = vmatmul.mubr.f32.gmra.mrb[0].mxu0 %v267
    %v352 = vpop.f32.mrb[0].mxu0
    %v353 = vadd.f32 0.0, %v352
    %v354 = vpop.f32.mrb[0].mxu0
    %355 = vmatprep.mubr.f32.mxu0 0.0
    %356 = vmatmul.mubr.f32.gmra.mrb[0].mxu0 %v270
    %v357 = vpop.f32.mrb[0].mxu0
    %v358 = vadd.f32 0.0, %v357
    %v359 = vpop.f32.mrb[0].mxu0
    %360 = vdwg.mxu0
    %v361 = vld [vmem:[#allocation7] sm:$0xff]
    %v362 = vld [vmem:[#allocation7 + $0x8] sm:$0xff]
    %v363 = vld [vmem:[#allocation7 + $0x10] sm:$0xff]
    %v364 = vld [vmem:[#allocation7 + $0x18] sm:$0xff]
    %v365 = vld [vmem:[#allocation2] sm:$0xf]
    %vm366 = vcmask 31744
    %v368 = vsel %vm366, %v361, 0
    %v371 = vsel %vm366, %v362, 0
    %v374 = vsel %vm366, %v363, 0
    %v377 = vsel %vm366, %v364, 0
    %vm379 = vcmask 1043456
    %v381 = vsel %vm379, %v365, 0
    %383 = vmatprep.subr.mxu0 0.0
    %384 = vmatpush1.msra.mxu0 %v381
    %385 = vmatprep.subr.mxu0 0.0
    %386 = vmatpush1.msra.mxu0 0.0
    %387 = vmatprep.subr.mxu0 0.0
    %388 = vmatpush1.msra.mxu0 0.0
    %389 = vmatprep.subr.mxu0 0.0
    %390 = vmatpush1.msra.mxu0 0.0
    %391 = vmatprep.subr.mxu0 0.0
    %392 = vmatpush1.msra.mxu0 0.0
    %393 = vmatprep.subr.mxu0 0.0
    %394 = vmatpush1.msra.mxu0 0.0
    %395 = vmatprep.subr.mxu0 0.0
    %396 = vmatpush1.msra.mxu0 0.0
    %397 = vmatprep.subr.mxu0 0.0
    %398 = vmatpush1.msra.mxu0 0.0
    %399 = vmatprep.subr.mxu0 0.0
    %400 = vmatpush1.msra.mxu0 0.0
    %401 = vmatprep.subr.mxu0 0.0
    %402 = vmatpush1.msra.mxu0 0.0
    %403 = vmatprep.subr.mxu0 0.0
    %404 = vmatpush1.msra.mxu0 0.0
    %405 = vmatprep.subr.mxu0 0.0
    %406 = vmatpush1.msra.mxu0 0.0
    %407 = vmatprep.subr.mxu0 0.0
    %408 = vmatpush1.msra.mxu0 0.0
    %409 = vmatprep.subr.mxu0 0.0
    %410 = vmatpush1.msra.mxu0 0.0
    %411 = vmatprep.subr.mxu0 0.0
    %412 = vmatpush1.msra.mxu0 0.0
    %413 = vmatprep.subr.mxu0 0.0
    %414 = vmatpush1.msra.mxu0 0.0
    %415 = vmatprep.subr.mxu0 0.0
    %416 = vmatpush1.msra.mxu0 0.0
    %417 = vmatprep.subr.mxu0 0.0
    %418 = vmatpush1.msra.mxu0 0.0
    %419 = vmatprep.subr.mxu0 0.0
    %420 = vmatpush1.msra.mxu0 0.0
    %421 = vmatprep.subr.mxu0 0.0
    %422 = vmatpush1.msra.mxu0 0.0
    %423 = vmatprep.subr.mxu0 0.0
    %424 = vmatpush1.msra.mxu0 0.0
    %425 = vmatprep.subr.mxu0 0.0
    %426 = vmatpush1.msra.mxu0 0.0
    %427 = vmatprep.subr.mxu0 0.0
    %428 = vmatpush1.msra.mxu0 0.0
    %429 = vmatprep.subr.mxu0 0.0
    %430 = vmatpush1.msra.mxu0 0.0
    %431 = vmatprep.subr.mxu0 0.0
    %432 = vmatpush1.msra.mxu0 0.0
    %433 = vmatprep.subr.mxu0 0.0
    %434 = vmatpush1.msra.mxu0 0.0
    %435 = vmatprep.subr.mxu0 0.0
    %436 = vmatpush1.msra.mxu0 0.0
    %437 = vmatprep.subr.mxu0 0.0
    %438 = vmatpush1.msra.mxu0 0.0
    %439 = vmatprep.subr.mxu0 0.0
    %440 = vmatpush1.msra.mxu0 0.0
    %441 = vmatprep.subr.mxu0 0.0
    %442 = vmatpush1.msra.mxu0 0.0
    %443 = vmatprep.subr.mxu0 0.0
    %444 = vmatpush1.msra.mxu0 0.0
    %445 = vmatprep.subr.mxu0 0.0
    %446 = vmatpush1.msra.mxu0 0.0
    %447 = vmatprep.mubr.f32.mxu0 0.0
    %448 = vmatmul.mubr.f32.gmra.mrb[0].mxu0 %v368
    %v449 = vpop.f32.mrb[0].mxu0
    %v450 = vadd.f32 0.0, %v449
    %v451 = vpop.f32.mrb[0].mxu0
    %452 = vmatprep.mubr.f32.mxu0 0.0
    %453 = vmatmul.mubr.f32.gmra.mrb[0].mxu0 %v371
    %v454 = vpop.f32.mrb[0].mxu0
    %v455 = vadd.f32 0.0, %v454
    %v456 = vpop.f32.mrb[0].mxu0
    %457 = vmatprep.mubr.f32.mxu0 0.0
    %458 = vmatmul.mubr.f32.gmra.mrb[0].mxu0 %v374
    %v459 = vpop.f32.mrb[0].mxu0
    %v460 = vadd.f32 0.0, %v459
    %v461 = vpop.f32.mrb[0].mxu0
    %462 = vmatprep.mubr.f32.mxu0 0.0
    %463 = vmatmul.mubr.f32.gmra.mrb[0].mxu0 %v377
    %v464 = vpop.f32.mrb[0].mxu0
    %v465 = vadd.f32 0.0, %v464
    %v466 = vpop.f32.mrb[0].mxu0
    %467 = vdwg.mxu0
    %v468 = vadd.f32 %v450, %v343
    %v469 = vadd.f32 %v455, %v348
    %v470 = vadd.f32 %v460, %v353
    %v471 = vadd.f32 %v465, %v358
    %v472 = vmax.f32 %v468, 0.0
    %v473 = vmax.f32 %v469, 0.0
    %v474 = vmax.f32 %v470, 0.0
    %v475 = vmax.f32 %v471, 0.0
    %v476 = vsub.f32 %v450, %v343
    %v477 = vsub.f32 %v455, %v348
    %v478 = vsub.f32 %v460, %v353
    %v479 = vsub.f32 %v465, %v358
    %v480 = vmul.f32 %v476, %v476
    %v481 = vmul.f32 %v477, %v477
    %v482 = vmul.f32 %v478, %v478
    %v483 = vmul.f32 %v479, %v479
    %v484 = vsub.f32 %v472, %v480
    %v485 = vsub.f32 %v473, %v481
    %v486 = vsub.f32 %v474, %v482
    %v487 = vsub.f32 %v475, %v483
    %v488 = vld [vmem:[#allocation11] sm:$0x3]
    %v489 = vld [vmem:[#allocation13] sm:$0x3]
    %491 = vset.pattern.permute.xlu0 0
    %492 = vperm.xlu0 %491, %v489
    %v493 = vpop.permute.xlu0 %492
    %vm495 = vcmask 261120
    %v497 = vsel %vm495, %v488, 0
    %499 = vmatprep.subr.mxu0 0.0
    %500 = vmatpush1.msra.mxu0 %v484
    %501 = vmatprep.subr.mxu0 0.0
    %502 = vmatpush1.msra.mxu0 %v485
    %503 = vmatprep.subr.mxu0 0.0
    %504 = vmatpush1.msra.mxu0 %v486
    %505 = vmatprep.subr.mxu0 0.0
    %506 = vmatpush1.msra.mxu0 %v487
    %507 = vmatprep.subr.mxu0 0.0
    %508 = vmatpush1.msra.mxu0 0.0
    %509 = vmatprep.subr.mxu0 0.0
    %510 = vmatpush1.msra.mxu0 0.0
    %511 = vmatprep.subr.mxu0 0.0
    %512 = vmatpush1.msra.mxu0 0.0
    %513 = vmatprep.subr.mxu0 0.0
    %514 = vmatpush1.msra.mxu0 0.0
    %515 = vmatprep.subr.mxu0 0.0
    %516 = vmatpush1.msra.mxu0 0.0
    %517 = vmatprep.subr.mxu0 0.0
    %518 = vmatpush1.msra.mxu0 0.0
    %519 = vmatprep.subr.mxu0 0.0
    %520 = vmatpush1.msra.mxu0 0.0
    %521 = vmatprep.subr.mxu0 0.0
    %522 = vmatpush1.msra.mxu0 0.0
    %523 = vmatprep.subr.mxu0 0.0
    %524 = vmatpush1.msra.mxu0 0.0
    %525 = vmatprep.subr.mxu0 0.0
    %526 = vmatpush1.msra.mxu0 0.0
    %527 = vmatprep.subr.mxu0 0.0
    %528 = vmatpush1.msra.mxu0 0.0
    %529 = vmatprep.subr.mxu0 0.0
    %530 = vmatpush1.msra.mxu0 0.0
    %531 = vmatprep.subr.mxu0 0.0
    %532 = vmatpush1.msra.mxu0 0.0
    %533 = vmatprep.subr.mxu0 0.0
    %534 = vmatpush1.msra.mxu0 0.0
    %535 = vmatprep.subr.mxu0 0.0
    %536 = vmatpush1.msra.mxu0 0.0
    %537 = vmatprep.subr.mxu0 0.0
    %538 = vmatpush1.msra.mxu0 0.0
    %539 = vmatprep.subr.mxu0 0.0
    %540 = vmatpush1.msra.mxu0 0.0
    %541 = vmatprep.subr.mxu0 0.0
    %542 = vmatpush1.msra.mxu0 0.0
    %543 = vmatprep.subr.mxu0 0.0
    %544 = vmatpush1.msra.mxu0 0.0
    %545 = vmatprep.subr.mxu0 0.0
    %546 = vmatpush1.msra.mxu0 0.0
    %547 = vmatprep.subr.mxu0 0.0
    %548 = vmatpush1.msra.mxu0 0.0
    %549 = vmatprep.subr.mxu0 0.0
    %550 = vmatpush1.msra.mxu0 0.0
    %551 = vmatprep.subr.mxu0 0.0
    %552 = vmatpush1.msra.mxu0 0.0
    %553 = vmatprep.subr.mxu0 0.0
    %554 = vmatpush1.msra.mxu0 0.0
    %555 = vmatprep.subr.mxu0 0.0
    %556 = vmatpush1.msra.mxu0 0.0
    %557 = vmatprep.subr.mxu0 0.0
    %558 = vmatpush1.msra.mxu0 0.0
    %559 = vmatprep.subr.mxu0 0.0
    %560 = vmatpush1.msra.mxu0 0.0
    %561 = vmatprep.subr.mxu0 0.0
    %562 = vmatpush1.msra.mxu0 0.0
    %563 = vmatprep.mubr.f32.mxu0 0.0
    %564 = vmatmul.mubr.f32.gmra.mrb[0].mxu0 %v497
    %v565 = vpop.f32.mrb[0].mxu0
    %v566 = vadd.f32 %v493, %v565
    %v567 = vpop.f32.mrb[0].mxu0
    %568 = vdwg.mxu0
    %vm569 = vcmask 254976
    %570 = vst.msk [vmem:[#allocation15] sm:$0x3] %vm569, %v566
    %vm571 = vcmask 123904
    %v572 = vsel %vm571, %v566, -inf
    %573 = vmax.xlane.f32.xlu0 %v572
    %v574 = vpop.xlane.xlu0 %573
    %v575 = vsub.f32 %v566, %v574
    %v576 = vmul.f32 %v575, 1.442695
    %v577 = vpow.pop %v576
    %v578 = vsel %vm571, %v577, 0.0
    %579 = vadd.xlane.f32.xlu0 %v578
    %v580 = vpop.xlane.xlu0 %579
    %v581 = vrcp.pop %v580
    %v582 = vmul.f32 %v577, %v581
    %v583 = vld [vmem:[#allocation2] sm:$0xf]
    %vm584 = vcmask 130048
    %v586 = vsel %vm584, %v582, 0
    %v589 = vsel %vm584, %v583, 0
    %591 = vmatprep.subr.mxu0 0.0
    %592 = vmatpush1.xpose.msra.mxu0 %v589
    %593 = vmatprep.subr.mxu0 0.0
    %594 = vmatpush1.xpose.msra.mxu0 0.0
    %595 = vmatprep.subr.mxu0 0.0
    %596 = vmatpush1.xpose.msra.mxu0 0.0
    %597 = vmatprep.subr.mxu0 0.0
    %598 = vmatpush1.xpose.msra.mxu0 0.0
    %599 = vmatprep.subr.mxu0 0.0
    %600 = vmatpush1.xpose.msra.mxu0 0.0
    %601 = vmatprep.subr.mxu0 0.0
    %602 = vmatpush1.xpose.msra.mxu0 0.0
    %603 = vmatprep.subr.mxu0 0.0
    %604 = vmatpush1.xpose.msra.mxu0 0.0
    %605 = vmatprep.subr.mxu0 0.0
    %606 = vmatpush1.xpose.msra.mxu0 0.0
    %607 = vmatprep.subr.mxu0 0.0
    %608 = vmatpush1.xpose.msra.mxu0 0.0
    %609 = vmatprep.subr.mxu0 0.0
    %610 = vmatpush1.xpose.msra.mxu0 0.0
    %611 = vmatprep.subr.mxu0 0.0
    %612 = vmatpush1.xpose.msra.mxu0 0.0
    %613 = vmatprep.subr.mxu0 0.0
    %614 = vmatpush1.xpose.msra.mxu0 0.0
    %615 = vmatprep.subr.mxu0 0.0
    %616 = vmatpush1.xpose.msra.mxu0 0.0
    %617 = vmatprep.subr.mxu0 0.0
    %618 = vmatpush1.xpose.msra.mxu0 0.0
    %619 = vmatprep.subr.mxu0 0.0
    %620 = vmatpush1.xpose.msra.mxu0 0.0
    %621 = vmatprep.subr.mxu0 0.0
    %622 = vmatpush1.xpose.msra.mxu0 0.0
    %623 = vmatprep.subr.mxu0 0.0
    %624 = vmatpush1.xpose.msra.mxu0 0.0
    %625 = vmatprep.subr.mxu0 0.0
    %626 = vmatpush1.xpose.msra.mxu0 0.0
    %627 = vmatprep.subr.mxu0 0.0
    %628 = vmatpush1.xpose.msra.mxu0 0.0
    %629 = vmatprep.subr.mxu0 0.0
    %630 = vmatpush1.xpose.msra.mxu0 0.0
    %631 = vmatprep.subr.mxu0 0.0
    %632 = vmatpush1.xpose.msra.mxu0 0.0
    %633 = vmatprep.subr.mxu0 0.0
    %634 = vmatpush1.xpose.msra.mxu0 0.0
    %635 = vmatprep.subr.mxu0 0.0
    %636 = vmatpush1.xpose.msra.mxu0 0.0
    %637 = vmatprep.subr.mxu0 0.0
    %638 = vmatpush1.xpose.msra.mxu0 0.0
    %639 = vmatprep.subr.mxu0 0.0
    %640 = vmatpush1.xpose.msra.mxu0 0.0
    %641 = vmatprep.subr.mxu0 0.0
    %642 = vmatpush1.xpose.msra.mxu0 0.0
    %643 = vmatprep.subr.mxu0 0.0
    %644 = vmatpush1.xpose.msra.mxu0 0.0
    %645 = vmatprep.subr.mxu0 0.0
    %646 = vmatpush1.xpose.msra.mxu0 0.0
    %647 = vmatprep.subr.mxu0 0.0
    %648 = vmatpush1.xpose.msra.mxu0 0.0
    %649 = vmatprep.subr.mxu0 0.0
    %650 = vmatpush1.xpose.msra.mxu0 0.0
    %651 = vmatprep.subr.mxu0 0.0
    %652 = vmatpush1.xpose.msra.mxu0 0.0
    %653 = vmatprep.subr.mxu0 0.0
    %654 = vmatpush1.xpose.msra.mxu0 0.0
    %655 = vmatprep.mubr.f32.mxu0 0.0
    %656 = vmatmul.mubr.f32.gmra.mrb[0].mxu0 %v586
    %v657 = vpop.f32.mrb[0].mxu0
    %v658 = vadd.f32 0.0, %v657
    %v659 = vpop.f32.mrb[0].mxu0
    %660 = vdwg.mxu0
    %vm661 = vcmask 25600
    %662 = vst.msk [vmem:[#allocation14] sm:$0x3] %vm661, %v658
    %vm663 = vcmask 255104
    %v664 = vsel %vm663, %v566, -inf
    %665 = vmax.xlane.f32.xlu0 %v664
    %v666 = vpop.xlane.xlu0 %665
    %v667 = vsub.f32 %v566, %v666
    %v668 = vmul.f32 %v667, 1.442695
    %v669 = vpow.pop %v668
    %671 = vrot.lane.b32.xlu0 %v669, 112
    %v672 = vpop.permute.xlu0 %671
    %v674 = vsel %vm571, %v672, 0.0
    %675 = vadd.xlane.f32.xlu0 %v674
    %v676 = vpop.xlane.xlu0 %675
    %v677 = vrcp.pop %v676
    %v678 = vmul.f32 %v669, %v677
    %v679 = vld [vmem:[#allocation2] sm:$0xf]
    %681 = vrot.lane.b32.xlu0 %v678, 112
    %v682 = vpop.permute.xlu0 %681
    %684 = vrot.lane.b32.xlu0 %v679, 112
    %v685 = vpop.permute.xlu0 %684
    %v686 = vsel %vm584, %v682, 0
    %v688 = vsel %vm584, %v685, 0
    %690 = vmatprep.subr.mxu0 0.0
    %691 = vmatpush1.xpose.msra.mxu0 %v688
    %692 = vmatprep.subr.mxu0 0.0
    %693 = vmatpush1.xpose.msra.mxu0 0.0
    %694 = vmatprep.subr.mxu0 0.0
    %695 = vmatpush1.xpose.msra.mxu0 0.0
    %696 = vmatprep.subr.mxu0 0.0
    %697 = vmatpush1.xpose.msra.mxu0 0.0
    %698 = vmatprep.subr.mxu0 0.0
    %699 = vmatpush1.xpose.msra.mxu0 0.0
    %700 = vmatprep.subr.mxu0 0.0
    %701 = vmatpush1.xpose.msra.mxu0 0.0
    %702 = vmatprep.subr.mxu0 0.0
    %703 = vmatpush1.xpose.msra.mxu0 0.0
    %704 = vmatprep.subr.mxu0 0.0
    %705 = vmatpush1.xpose.msra.mxu0 0.0
    %706 = vmatprep.subr.mxu0 0.0
    %707 = vmatpush1.xpose.msra.mxu0 0.0
    %708 = vmatprep.subr.mxu0 0.0
    %709 = vmatpush1.xpose.msra.mxu0 0.0
    %710 = vmatprep.subr.mxu0 0.0
    %711 = vmatpush1.xpose.msra.mxu0 0.0
    %712 = vmatprep.subr.mxu0 0.0
    %713 = vmatpush1.xpose.msra.mxu0 0.0
    %714 = vmatprep.subr.mxu0 0.0
    %715 = vmatpush1.xpose.msra.mxu0 0.0
    %716 = vmatprep.subr.mxu0 0.0
    %717 = vmatpush1.xpose.msra.mxu0 0.0
    %718 = vmatprep.subr.mxu0 0.0
    %719 = vmatpush1.xpose.msra.mxu0 0.0
    %720 = vmatprep.subr.mxu0 0.0
    %721 = vmatpush1.xpose.msra.mxu0 0.0
    %722 = vmatprep.subr.mxu0 0.0
    %723 = vmatpush1.xpose.msra.mxu0 0.0
    %724 = vmatprep.subr.mxu0 0.0
    %725 = vmatpush1.xpose.msra.mxu0 0.0
    %726 = vmatprep.subr.mxu0 0.0
    %727 = vmatpush1.xpose.msra.mxu0 0.0
    %728 = vmatprep.subr.mxu0 0.0
    %729 = vmatpush1.xpose.msra.mxu0 0.0
    %730 = vmatprep.subr.mxu0 0.0
    %731 = vmatpush1.xpose.msra.mxu0 0.0
    %732 = vmatprep.subr.mxu0 0.0
    %733 = vmatpush1.xpose.msra.mxu0 0.0
    %734 = vmatprep.subr.mxu0 0.0
    %735 = vmatpush1.xpose.msra.mxu0 0.0
    %736 = vmatprep.subr.mxu0 0.0
    %737 = vmatpush1.xpose.msra.mxu0 0.0
    %738 = vmatprep.subr.mxu0 0.0
    %739 = vmatpush1.xpose.msra.mxu0 0.0
    %740 = vmatprep.subr.mxu0 0.0
    %741 = vmatpush1.xpose.msra.mxu0 0.0
    %742 = vmatprep.subr.mxu0 0.0
    %743 = vmatpush1.xpose.msra.mxu0 0.0
    %744 = vmatprep.subr.mxu0 0.0
    %745 = vmatpush1.xpose.msra.mxu0 0.0
    %746 = vmatprep.subr.mxu0 0.0
    %747 = vmatpush1.xpose.msra.mxu0 0.0
    %748 = vmatprep.subr.mxu0 0.0
    %749 = vmatpush1.xpose.msra.mxu0 0.0
    %750 = vmatprep.subr.mxu0 0.0
    %751 = vmatpush1.xpose.msra.mxu0 0.0
    %752 = vmatprep.subr.mxu0 0.0
    %753 = vmatpush1.xpose.msra.mxu0 0.0
    %754 = vmatprep.mubr.f32.mxu0 0.0
    %755 = vmatmul.mubr.f32.gmra.mrb[0].mxu0 %v686
    %v756 = vpop.f32.mrb[0].mxu0
    %v757 = vadd.f32 0.0, %v756
    %v758 = vpop.f32.mrb[0].mxu0
    %759 = vdwg.mxu0
    %s760 = scalar_lea.vmem [#allocation14], 2
    %761 = vst.msk [vmem:[%s760] sm:$0x3] %vm661, %v757
    // Predicated region
    $region58: #{tpu_custom_call.1} parent=1 // pred_check
      _
    $region59: #{tpu_custom_call.1} parent=1 // pred_check_branch
      %763 = sbr.rel (0) target = $region61
    $region60: #{tpu_custom_call.1} parent=1 // pred_region
      %s765 = ssub.s32 64, 64
      %766 = vsyncadd [#allocation4], %s765
      %s767 = sshll.u32 [#allocation14], 4
      %s768 = int_to_ptr.vmem [resolvable:$true] %s767
      %773 = dma.vmem_to_hbm [thread:$0]  %s768, 64, %s7, [#allocation4], 32, 32, 2
    $region61: #{tpu_custom_call.1} parent=1 // pred_fallthru
      _
    // Predicated region
    $region62: #{tpu_custom_call.1} parent=1 // pred_check
      _
    $region63: #{tpu_custom_call.1} parent=1 // pred_check_branch
      %775 = sbr.rel (0) target = $region65
    $region64: #{tpu_custom_call.1} parent=1 // pred_region
      %s777 = ssub.s32 32, 32
      %778 = vsyncadd [#allocation16], %s777
      %s780 = sshll.u32 [#allocation15], 4
      %s781 = int_to_ptr.vmem [resolvable:$true] %s780
      %783 = dma.vmem_to_hbm [thread:$0]  %s781, 32, %s8, [#allocation16]
    $region65: #{tpu_custom_call.1} parent=1 // pred_fallthru
      _
    // Predicated region
    $region66: #{tpu_custom_call.1} parent=1 // pred_check
      _
    $region67: #{tpu_custom_call.1} parent=1 // pred_check_branch
      %785 = sbr.rel (0) target = $region69
    $region68: #{tpu_custom_call.1} parent=1 // pred_region
      %786 = dma.done [#allocation4], 64
    $region69: #{tpu_custom_call.1} parent=1 // pred_fallthru
      _
    // Predicated region
    $region70: #{tpu_custom_call.1} parent=1 // pred_check
      _
    $region71: #{tpu_custom_call.1} parent=1 // pred_check_branch
      %788 = sbr.rel (0) target = $region73
    $region72: #{tpu_custom_call.1} parent=1 // pred_region
      %789 = dma.done [#allocation16], 32
    $region73: #{tpu_custom_call.1} parent=1 // pred_fallthru
      _
    %790 = vsyncpa [#allocation3], 1
    %791 = vsyncpa [#allocation6], 1
    %792 = vsyncpa [#allocation9], 1
    %793 = vsyncpa [#allocation12], 1
    %794 = vsyncpa [#allocation4], 1
    %795 = vsyncpa [#allocation16], 1

</llo_original>
